<compile_context>
chip_gen: v7x
topology: tpu7x:2x2x1
jax: 0.10.0
libtpu: 0.0.40
codegen_flags: <defaults>
</compile_context>

<pallas_src>
import jax
import jax.numpy as jnp
from jax.experimental import pallas as pl
from jax.experimental.pallas import tpu as pltpu


def _round_up(n: int, m: int) -> int:
    return ((n + m - 1) // m) * m


def nlsm_kernel(xT_ref, w1_ref, b1_ref, w3_ref, b3_ref, out_ref):
    """One batch tile, features-major orientation.

    xT_ref : (D, TB) VMEM -- streamed per grid step (batch lives in the lane dim)
    w1_ref : (H, D)  VMEM -- resident across the grid (constant index_map)
    b1_ref : (H, 1)  VMEM -- resident
    w3_ref : (H, 1)  VMEM -- resident
    b3_ref : (1,)    SMEM -- scalar bias
    out_ref: (1, TB) VMEM -- lane-dense output row
    """
    # layer1: (H, D) @ (D, TB) -> (H, TB).  Native MXU orientation: the streamed
    # x tile needs no relayout/vxpose (the main fix from the perf review).
    h = jnp.dot(w1_ref[...], xT_ref[...], preferred_element_type=jnp.float32)
    h = h + b1_ref[...]                              # (H, 1) broadcasts over TB lanes
    # LeakyReLU(negative_slope=0.5): max(h, 0.5h) == where(h >= 0, h, 0.5h) for
    # slope < 1, and it is 2 VPU ops (mul+max) instead of 3 (cmp+mul+select).
    h = jnp.maximum(h, 0.5 * h)
    # layer3 (H -> 1): VPU multiply + sublane reduce into a lane-dense (1, TB) row.
    o = jnp.sum(h * w3_ref[...], axis=0, keepdims=True)
    out_ref[...] = (o + b3_ref[0]).astype(out_ref.dtype)


def prepare_params(w1, b1, w3, b3, *, dtype=jnp.float32):
    """Hoist the parameter glue out of the per-call path (run once at setup).

    PyTorch shapes: w1 (H, D), b1 (H,), w3 (1, H), b3 (1,).
    `dtype` only affects W1 (pass jnp.bfloat16 together with bf16 x for the bf16
    streaming path); biases and w3 stay f32, accumulation is always f32.
    """
    H = w1.shape[0]
    return (
        jnp.asarray(w1).astype(dtype),                      # (H, D)
        jnp.asarray(b1).reshape(H, 1).astype(jnp.float32),  # (H, 1)
        jnp.asarray(w3).reshape(H, 1).astype(jnp.float32),  # (H, 1)
        jnp.asarray(b3).reshape(1).astype(jnp.float32),     # (1,) SMEM scalar
    )


def network_nlsm_forward_xt(xT, w1, b1c, w3c, b3, *, block_rows=65536, x_buffers=2):
    """Fast path: xT is (D, B) = (nb_stocks+1, batch). Returns (B,) f32."""
    D, B = xT.shape
    H = w1.shape[0]

    if B <= 128:
        tb = B  # full-extent block satisfies the (8, 128) rule by equality
    else:
        tb = min(block_rows, _round_up(B, 128))
        # Keep >= 2 grid steps so v7x's two TensorCores both get work under
        # dimension_semantics=("parallel",); harmless on v5e/v6e.
        tb = min(tb, _round_up(pl.cdiv(B, 2), 128))
    num_tiles = pl.cdiv(B, tb)  # edge block is clipped by Pallas; no jnp.pad copy

    x_spec_kwargs = {}
    if x_buffers != 2:
        # v5e knob: pl.Buffered(3) on the x stream hides residual DMA latency if a
        # profile still shows exposed DMA after tile enlargement.
        x_spec_kwargs["pipeline_mode"] = pl.Buffered(x_buffers)

    itemsize = jnp.dtype(xT.dtype).itemsize
    out_row = pl.pallas_call(
        nlsm_kernel,
        out_shape=jax.ShapeDtypeStruct((1, B), jnp.float32),
        grid=(num_tiles,),
        in_specs=[
            pl.BlockSpec((D, tb), lambda i: (0, i), **x_spec_kwargs),  # x: streamed
            pl.BlockSpec((H, D), lambda i: (0, 0)),                    # W1: resident
            pl.BlockSpec((H, 1), lambda i: (0, 0)),                    # b1: resident
            pl.BlockSpec((H, 1), lambda i: (0, 0)),                    # w3: resident
            pl.BlockSpec(memory_space=pltpu.MemorySpace.SMEM),         # b3: scalar
        ],
        out_specs=pl.BlockSpec((1, tb), lambda i: (0, i)),             # lane-dense row
        compiler_params=pltpu.CompilerParams(
            dimension_semantics=("parallel",),      # shard batch tiles across TCs (v7x)
            vmem_limit_bytes=48 * 1024 * 1024,      # big tiles; < 64 MiB/TC on v7x
        ),
        cost_estimate=pl.CostEstimate(
            flops=2 * H * (D + 1) * B,
            transcendentals=0,
            bytes_accessed=D * B * itemsize + 4 * B + 4 * (H * (D + 2) + 1),
        ),
    )(xT, w1, b1c, w3c, b3)
    return out_row[0]  # (B,)


def network_nlsm_forward(x, w1, b1c, w3c, b3, *, block_rows=65536, x_buffers=2):
    """Module-semantics entry: x is (B, nb_stocks+1); returns (B, 1) like PyTorch.

    Does a one-time relayout of x to (D, B).  In production the producer should
    emit x as (D, B) and call network_nlsm_forward_xt directly: a (B, 6) f32 array
    is lane-padded ~21x in TPU HBM, so the (D, B) orientation also cuts the HBM
    footprint/traffic of x itself.
    """
    out = network_nlsm_forward_xt(
        x.T, w1, b1c, w3c, b3, block_rows=block_rows, x_buffers=x_buffers
    )
    return out[:, None]


def network_nlsm_ref(x, w1, b1, w3, b3):
    """Pure-JAX reference using the original PyTorch parameter shapes."""
    h = x @ w1.T + b1
    h = jnp.where(h >= 0, h, 0.5 * h)
    return jnp.sum(h * w3, axis=-1, keepdims=True) + b3


if __name__ == "__main__":
    nb_stocks = 5          # input dim = nb_stocks + 1 = 6
    hidden = 10            # module default hidden_size
    batch = 2048
    D = nb_stocks + 1

    key = jax.random.PRNGKey(0)
    kx, k1, k2, k3, k4 = jax.random.split(key, 5)

    def bf16_exact(a):
        # Make test data exactly representable in bf16 so the comparison does not
        # depend on the MXU's f32 pass strategy (bf16 passes are then exact).
        return a.astype(jnp.bfloat16).astype(jnp.float32)

    x = bf16_exact(jax.random.normal(kx, (batch, D), dtype=jnp.float32))
    w1 = bf16_exact(0.1 * jax.random.normal(k1, (hidden, D), dtype=jnp.float32))
    b1 = bf16_exact(0.1 * jax.random.normal(k2, (hidden,), dtype=jnp.float32))
    w3 = bf16_exact(0.1 * jax.random.normal(k3, (1, hidden), dtype=jnp.float32))
    b3 = bf16_exact(0.1 * jax.random.normal(k4, (1,), dtype=jnp.float32))

    params = prepare_params(w1, b1, w3, b3)
    ref = network_nlsm_ref(x, w1, b1, w3, b3)

    fwd = jax.jit(network_nlsm_forward, static_argnames=("block_rows", "x_buffers"))
    fwd_xt = jax.jit(network_nlsm_forward_xt, static_argnames=("block_rows", "x_buffers"))

    # 1) Module-semantics path, small tile for the smoke test -> 4 grid steps.
    out = jax.block_until_ready(fwd(x, *params, block_rows=512))
    assert out.shape == (batch, 1), out.shape
    assert jnp.allclose(out, ref, atol=1e-5, rtol=1e-5), "mismatch vs reference"

    # 2) Default (large-tile) config: >=2-tiles rule gives 2 grid steps here.
    out_d = jax.block_until_ready(fwd(x, *params))
    assert jnp.allclose(out_d, ref, atol=1e-5, rtol=1e-5), "mismatch (default tiles)"

    # 3) Fast path with x pre-transposed to (D, B) -- no relayout anywhere.
    xT = jnp.asarray(x.T)
    out_t = jax.block_until_ready(fwd_xt(xT, *params, block_rows=512))
    assert out_t.shape == (batch,), out_t.shape
    assert jnp.allclose(out_t[:, None], ref, atol=1e-5, rtol=1e-5), "mismatch (xt path)"

    # 4) Ragged batch: exercises the pl.cdiv edge-block path (no jnp.pad copy).
    xr = x[:1000]
    out_r = jax.block_until_ready(fwd(xr, *params, block_rows=512))
    ref_r = network_nlsm_ref(xr, w1, b1, w3, b3)
    assert out_r.shape == (1000, 1), out_r.shape
    assert jnp.allclose(out_r, ref_r, atol=1e-5, rtol=1e-5), "mismatch (ragged)"

    # 5) bf16 streaming path (x and W1 in bf16, f32 accumulation in-kernel).
    params_bf16 = prepare_params(w1, b1, w3, b3, dtype=jnp.bfloat16)
    out_bf = jax.block_until_ready(
        fwd(x.astype(jnp.bfloat16), *params_bf16, block_rows=512)
    )
    assert jnp.allclose(out_bf, ref, atol=1e-5, rtol=1e-5), "mismatch (bf16 path)"

    print("KERNEL_OK")
</pallas_src>

<mosaic_0001>
module attributes {stable_mosaic.version = 11 : i64} {
  func.func @nlsm_kernel(%arg0: i32, %arg1: memref<6x512xf32, #tpu.memory_space<vmem>>, %arg2: memref<10x6xf32, #tpu.memory_space<vmem>>, %arg3: memref<10x1xf32, #tpu.memory_space<vmem>>, %arg4: memref<10x1xf32, #tpu.memory_space<vmem>>, %arg5: memref<1xf32, #tpu.memory_space<smem>>, %arg6: memref<1x512xf32, #tpu.memory_space<vmem>>) attributes {dimension_semantics = [#tpu.dimension_semantics<parallel>], iteration_bounds = array<i64: 4>, scalar_prefetch = 0 : i64, scratch_operands = 0 : i64, tpu.core_type = #tpu.core_type<tc>, window_params = [{transform_indices = @transform_0, window_bounds = array<i64: 6, 512>}, {pipeline_mode = #tpu.pipeline_mode<synchronous>, transform_indices = @transform_1, window_bounds = array<i64: 10, 6>}, {pipeline_mode = #tpu.pipeline_mode<synchronous>, transform_indices = @transform_2, window_bounds = array<i64: 10, 1>}, {pipeline_mode = #tpu.pipeline_mode<synchronous>, transform_indices = @transform_3, window_bounds = array<i64: 10, 1>}, {transform_indices = @transform_4, window_bounds = array<i64: 1>}, {transform_indices = @transform_5, window_bounds = array<i64: 1, 512>}]} {
    %c0 = arith.constant 0 : index
    %c0_0 = arith.constant 0 : index
    %0 = vector.load %arg2[%c0, %c0_0] : memref<10x6xf32, #tpu.memory_space<vmem>>, vector<10x6xf32>
    %c0_1 = arith.constant 0 : index
    %c0_2 = arith.constant 0 : index
    %1 = vector.load %arg1[%c0_1, %c0_2] : memref<6x512xf32, #tpu.memory_space<vmem>>, vector<6x512xf32>
    %cst = arith.constant dense<0.000000e+00> : vector<10x512xf32>
    %2 = tpu.matmul %0, %1, %cst {dimension_numbers = #tpu.dot_dimension_numbers<[1], [0], [0], [1], [0, 0, 1, 1], [], []>} : vector<10x6xf32>, vector<6x512xf32>, vector<10x512xf32> -> vector<10x512xf32>
    %c0_3 = arith.constant 0 : index
    %c0_4 = arith.constant 0 : index
    %3 = vector.load %arg3[%c0_3, %c0_4] : memref<10x1xf32, #tpu.memory_space<vmem>>, vector<10x1xf32>
    %4 = vector.broadcast %3 : vector<10x1xf32> to vector<10x512xf32>
    %5 = arith.addf %2, %4 : vector<10x512xf32>
    %cst_5 = arith.constant 5.000000e-01 : f32
    %6 = vector.broadcast %cst_5 : f32 to vector<10x512xf32>
    %7 = arith.mulf %6, %5 : vector<10x512xf32>
    %8 = arith.maximumf %5, %7 : vector<10x512xf32>
    %c0_6 = arith.constant 0 : index
    %c0_7 = arith.constant 0 : index
    %9 = vector.load %arg4[%c0_6, %c0_7] : memref<10x1xf32, #tpu.memory_space<vmem>>, vector<10x1xf32>
    %10 = vector.broadcast %9 : vector<10x1xf32> to vector<10x512xf32>
    %11 = arith.mulf %8, %10 : vector<10x512xf32>
    %cst_8 = arith.constant dense<0.000000e+00> : vector<512xf32>
    %12 = vector.multi_reduction <add>, %11, %cst_8 [0] : vector<10x512xf32> to vector<512xf32>
    %13 = vector.shape_cast %12 : vector<512xf32> to vector<1x512xf32>
    %c0_9 = arith.constant 0 : index
    %14 = memref.load %arg5[%c0_9] : memref<1xf32, #tpu.memory_space<smem>>
    %15 = vector.broadcast %14 : f32 to vector<1x512xf32>
    %16 = arith.addf %13, %15 : vector<1x512xf32>
    %c0_10 = arith.constant 0 : index
    %c0_11 = arith.constant 0 : index
    %17 = vector.load %arg6[%c0_10, %c0_11] : memref<1x512xf32, #tpu.memory_space<vmem>>, vector<1x512xf32>
    tpu.vector_store %arg6[%c0_10, %c0_11], %16 {strides = array<i32>} : memref<1x512xf32, #tpu.memory_space<vmem>>, vector<1x512xf32>,
    return
  }
  func.func @transform_0(%arg0: i32) -> (i32, i32) {
    %c0_i32 = arith.constant 0 : i32
    %c0_i32_0 = arith.constant 0 : i32
    return %c0_i32, %arg0 : i32, i32
  }
  func.func @transform_1(%arg0: i32) -> (i32, i32) {
    %c0_i32 = arith.constant 0 : i32
    %c0_i32_0 = arith.constant 0 : i32
    %c0_i32_1 = arith.constant 0 : i32
    return %c0_i32, %c0_i32_0 : i32, i32
  }
  func.func @transform_2(%arg0: i32) -> (i32, i32) {
    %c0_i32 = arith.constant 0 : i32
    %c0_i32_0 = arith.constant 0 : i32
    %c0_i32_1 = arith.constant 0 : i32
    return %c0_i32, %c0_i32_0 : i32, i32
  }
  func.func @transform_3(%arg0: i32) -> (i32, i32) {
    %c0_i32 = arith.constant 0 : i32
    %c0_i32_0 = arith.constant 0 : i32
    %c0_i32_1 = arith.constant 0 : i32
    return %c0_i32, %c0_i32_0 : i32, i32
  }
  func.func @transform_4(%arg0: i32) -> i32 {
    %c0_i32 = arith.constant 0 : i32
    %c0_i32_0 = arith.constant 0 : i32
    return %c0_i32 : i32
  }
  func.func @transform_5(%arg0: i32) -> (i32, i32) {
    %c0_i32 = arith.constant 0 : i32
    %c0_i32_0 = arith.constant 0 : i32
    return %c0_i32, %arg0 : i32, i32
  }
}

</mosaic_0001>

<llo_original>
// kernel: network_nlsm_forward.1
$region0: #{network_nlsm_forward.1}
  #allocation0 [shape = 'u32[]', space=smem, size = 0x4, offset = 0x4, fixed_abs, tag = 'smem constant byte address 0x4 - core index']
  #allocation1 [shape = 'u32[144,128]{1,0:T(1,128)}', space=vmem, size = 0x12000, scoped, tag = 'internal scratch']
  #allocation2 [shape = 'f32[1]{0:T(128)S(6)}', space=smem, size = 0x200, scoped, tag = 'scoped memory for network_nlsm_forward.1']
  %s0 = inlined_call_operand.hbm [shape: f32[6,2048], index: 0, kind: input, shape index: {}]
  %s1 = inlined_call_operand.vmem [shape: f32[10,6], index: 1, kind: input, shape index: {}]
  %s2 = inlined_call_operand.vmem [shape: f32[10,1], index: 2, kind: input, shape index: {}]
  %s3 = inlined_call_operand.vmem [shape: f32[10,1], index: 3, kind: input, shape index: {}]
  %s4 = inlined_call_operand.<no memory space> [shape: f32[1], index: 4, kind: input, shape index: {}]
  %s5 = inlined_call_operand.hbm [shape: f32[1,2048], index: 5, kind: output, shape index: {}]
  %s6 = sld [smem:[#allocation0]]
  $region57: #{network_nlsm_forward.1} parent=0
    _
  %s8 = ssub.s32 1, %s6
  %s9 = scalar_select 0, %s8, %s6
  %10 = sst [smem:[#allocation2]] %s4
  $region1: #{network_nlsm_forward.1} parent=0
    #allocation3 [shape = 'u8[32768]{0}', space=vmem, size = 0x8000, scoped, tag = 'input window, operand 0']
    #allocation4 [shape = 's32[2]{0}', space=sflag, size = 0x8, scoped, tag = 'scoped memory for network_nlsm_forward.1']
    #allocation5 [shape = 's32[2]{0}', space=sflag, size = 0x8, scoped, tag = 'scoped memory for network_nlsm_forward.1']
    #allocation6 [shape = 'u8[4096]{0}', space=vmem, size = 0x1000, scoped, tag = 'output window, operand 0']
    %11 = vsyncpa [#allocation4], 0
    %s12 = scalar_lea.sflag [#allocation4], 1
    %13 = vsyncpa %s12, 0
    %14 = vsyncpa [#allocation5], 0
    %s15 = scalar_lea.sflag [#allocation5], 1
    %16 = vsyncpa %s15, 0
    loop: start=0, step=1, limit=6
    $region2: #{network_nlsm_forward.1} parent=1 // loop_pre_header
      _
    $region3: #{network_nlsm_forward.1} parent=1 // loop_header
      %s18 = sphi 0, %s22
      %p19 = scmp.ge.s32.totalorder %s18, 6
      %s28 = sphi 0, %s30
      %s31 = sphi 0, %s28
      %s32 = sphi 0, %s31
      %s48 = sphi 0, %s32
      %s52 = sphi 0, %s52
      %s54 = sphi 0, %s52
      %s55 = sphi 0, %s54
      %s69 = sphi 0, %s55
      %s73 = sphi 0, %s73
      %s75 = sphi 0, %s73
      %s76 = sphi 0, %s75
      %s90 = sphi 0, %s76
      %s94 = sphi 0, %s94
      %s96 = sphi 0, %s94
      %s97 = sphi 0, %s96
      %s111 = sphi 0, %s97
      %s115 = sphi 0, %s115
      %s117 = sphi 0, %s115
      %s118 = sphi 0, %s117
      %s132 = sphi 0, %s118
      %s138 = sphi 0, %s140
      %s141 = sphi 0, %s138
      %s142 = sphi 0, %s141
      %s158 = sphi 0, %s142
    $region4: #{network_nlsm_forward.1} parent=1 // loop_header_branch
      %21 = sbr.rel (%p19) target = $region8
    $region5: #{network_nlsm_forward.1} parent=1 // loop_body
      %s23 = ssub.s32 %s18, 1
      %s24 = ssub.s32 %s18, 2
      %s25 = sadd.s32 %s18, 1
      %s26 = ssub.s32 %s18, %s25
      %p27 = scmp.eq.s32.totalorder %s26, 0
      %s29 = sadd.s32 %s28, 1
      %s30 = scalar_select %p27, %s28, %s29
      %p33 = pneg %p27
      %p34 = scmp.eq.s32.totalorder %s18, 3
      %p35 = por %p33, %p34
      %p36 = scmp.ne.s32.totalorder %s28, %s31
      %p37 = scmp.eq.s32.totalorder %s18, 0
      %p38 = por %p36, %p37
      %p39 = scmp.ne.s32.totalorder %s28, %s31
      %p40 = scmp.eq.s32.totalorder %s23, 3
      %p41 = por %p39, %p40
      %p42 = scmp.ne.s32.totalorder %s31, %s32
      %p43 = scmp.eq.s32.totalorder %s23, 0
      %p44 = por %p42, %p43
      %p45 = scmp.ne.s32.totalorder %s31, %s32
      %p46 = scmp.eq.s32.totalorder %s24, 3
      %p47 = por %p45, %p46
      %p49 = scmp.ne.s32.totalorder %s32, %s48
      %p50 = scmp.eq.s32.totalorder %s24, 0
      %p51 = por %p49, %p50
      %s53 = sadd.s32 %s52, 1
      %p56 = scmp.eq.s32.totalorder %s18, 3
      %p57 = scmp.ne.s32.totalorder %s52, %s54
      %p58 = scmp.eq.s32.totalorder %s18, 0
      %p59 = por %p57, %p58
      %p60 = scmp.ne.s32.totalorder %s52, %s54
      %p61 = scmp.eq.s32.totalorder %s23, 3
      %p62 = por %p60, %p61
      %p63 = scmp.ne.s32.totalorder %s54, %s55
      %p64 = scmp.eq.s32.totalorder %s23, 0
      %p65 = por %p63, %p64
      %p66 = scmp.ne.s32.totalorder %s54, %s55
      %p67 = scmp.eq.s32.totalorder %s24, 3
      %p68 = por %p66, %p67
      %p70 = scmp.ne.s32.totalorder %s55, %s69
      %p71 = scmp.eq.s32.totalorder %s24, 0
      %p72 = por %p70, %p71
      %s74 = sadd.s32 %s73, 1
      %p77 = scmp.eq.s32.totalorder %s18, 3
      %p78 = scmp.ne.s32.totalorder %s73, %s75
      %p79 = scmp.eq.s32.totalorder %s18, 0
      %p80 = por %p78, %p79
      %p81 = scmp.ne.s32.totalorder %s73, %s75
      %p82 = scmp.eq.s32.totalorder %s23, 3
      %p83 = por %p81, %p82
      %p84 = scmp.ne.s32.totalorder %s75, %s76
      %p85 = scmp.eq.s32.totalorder %s23, 0
      %p86 = por %p84, %p85
      %p87 = scmp.ne.s32.totalorder %s75, %s76
      %p88 = scmp.eq.s32.totalorder %s24, 3
      %p89 = por %p87, %p88
      %p91 = scmp.ne.s32.totalorder %s76, %s90
      %p92 = scmp.eq.s32.totalorder %s24, 0
      %p93 = por %p91, %p92
      %s95 = sadd.s32 %s94, 1
      %p98 = scmp.eq.s32.totalorder %s18, 3
      %p99 = scmp.ne.s32.totalorder %s94, %s96
      %p100 = scmp.eq.s32.totalorder %s18, 0
      %p101 = por %p99, %p100
      %p102 = scmp.ne.s32.totalorder %s94, %s96
      %p103 = scmp.eq.s32.totalorder %s23, 3
      %p104 = por %p102, %p103
      %p105 = scmp.ne.s32.totalorder %s96, %s97
      %p106 = scmp.eq.s32.totalorder %s23, 0
      %p107 = por %p105, %p106
      %p108 = scmp.ne.s32.totalorder %s96, %s97
      %p109 = scmp.eq.s32.totalorder %s24, 3
      %p110 = por %p108, %p109
      %p112 = scmp.ne.s32.totalorder %s97, %s111
      %p113 = scmp.eq.s32.totalorder %s24, 0
      %p114 = por %p112, %p113
      %s116 = sadd.s32 %s115, 1
      %p119 = scmp.eq.s32.totalorder %s18, 3
      %p120 = scmp.ne.s32.totalorder %s115, %s117
      %p121 = scmp.eq.s32.totalorder %s18, 0
      %p122 = por %p120, %p121
      %p123 = scmp.ne.s32.totalorder %s115, %s117
      %p124 = scmp.eq.s32.totalorder %s23, 3
      %p125 = por %p123, %p124
      %p126 = scmp.ne.s32.totalorder %s117, %s118
      %p127 = scmp.eq.s32.totalorder %s23, 0
      %p128 = por %p126, %p127
      %p129 = scmp.ne.s32.totalorder %s117, %s118
      %p130 = scmp.eq.s32.totalorder %s24, 3
      %p131 = por %p129, %p130
      %p133 = scmp.ne.s32.totalorder %s118, %s132
      %p134 = scmp.eq.s32.totalorder %s24, 0
      %p135 = por %p133, %p134
      %s136 = ssub.s32 %s18, %s25
      %p137 = scmp.eq.s32.totalorder %s136, 0
      %s139 = sadd.s32 %s138, 1
      %s140 = scalar_select %p137, %s138, %s139
      %p143 = pneg %p137
      %p144 = scmp.eq.s32.totalorder %s18, 3
      %p145 = por %p143, %p144
      %p146 = scmp.ne.s32.totalorder %s138, %s141
      %p147 = scmp.eq.s32.totalorder %s18, 0
      %p148 = por %p146, %p147
      %p149 = scmp.ne.s32.totalorder %s138, %s141
      %p150 = scmp.eq.s32.totalorder %s23, 3
      %p151 = por %p149, %p150
      %p152 = scmp.ne.s32.totalorder %s141, %s142
      %p153 = scmp.eq.s32.totalorder %s23, 0
      %p154 = por %p152, %p153
      %p155 = scmp.ne.s32.totalorder %s141, %s142
      %p156 = scmp.eq.s32.totalorder %s24, 3
      %p157 = por %p155, %p156
      %p159 = scmp.ne.s32.totalorder %s142, %s158
      %p160 = scmp.eq.s32.totalorder %s24, 0
      %p161 = por %p159, %p160
      %p162 = scmp.le.s32.totalorder 1, %s18
      %p163 = scmp.lt.s32.totalorder %s18, 5
      %p164 = pnand %p162, %p163
      %p165 = pneg %p164
      // Predicated region
      $region9: #{network_nlsm_forward.1} parent=5 // pred_check
        _
      $region10: #{network_nlsm_forward.1} parent=5 // pred_check_branch
        %167 = sbr.rel (%p164) target = $region12
      $region11: #{network_nlsm_forward.1} parent=5 // pred_region
        %s168 = ssub.s32 %s18, 1
        // Predicated region
        $region13: #{network_nlsm_forward.1} parent=11 // pred_check
          %p169 = pneg %p65
        $region14: #{network_nlsm_forward.1} parent=11 // pred_check_branch
          %171 = sbr.rel (%p169) target = $region16
        $region15: #{network_nlsm_forward.1} parent=11 // pred_region
          _
        $region16: #{network_nlsm_forward.1} parent=11 // pred_fallthru
          _
        // Predicated region
        $region17: #{network_nlsm_forward.1} parent=11 // pred_check
          %p172 = pneg %p86
        $region18: #{network_nlsm_forward.1} parent=11 // pred_check_branch
          %174 = sbr.rel (%p172) target = $region20
        $region19: #{network_nlsm_forward.1} parent=11 // pred_region
          _
        $region20: #{network_nlsm_forward.1} parent=11 // pred_fallthru
          _
        // Predicated region
        $region21: #{network_nlsm_forward.1} parent=11 // pred_check
          %p175 = pneg %p107
        $region22: #{network_nlsm_forward.1} parent=11 // pred_check_branch
          %177 = sbr.rel (%p175) target = $region24
        $region23: #{network_nlsm_forward.1} parent=11 // pred_region
          _
        $region24: #{network_nlsm_forward.1} parent=11 // pred_fallthru
          _
        // Predicated region
        $region25: #{network_nlsm_forward.1} parent=11 // pred_check
          %p178 = pneg %p128
        $region26: #{network_nlsm_forward.1} parent=11 // pred_check_branch
          %180 = sbr.rel (%p178) target = $region28
        $region27: #{network_nlsm_forward.1} parent=11 // pred_region
          _
        $region28: #{network_nlsm_forward.1} parent=11 // pred_fallthru
          _
      $region12: #{network_nlsm_forward.1} parent=5 // pred_fallthru
        _
      %p181 = scmp.lt.s32.totalorder %s18, 4
      // Predicated region
      $region29: #{network_nlsm_forward.1} parent=5 // pred_check
        %p182 = pneg %p181
      $region30: #{network_nlsm_forward.1} parent=5 // pred_check_branch
        %184 = sbr.rel (%p182) target = $region32
      $region31: #{network_nlsm_forward.1} parent=5 // pred_region
        // Predicated region
        $region33: #{network_nlsm_forward.1} parent=31 // pred_check
          %p185 = pneg %p38
        $region34: #{network_nlsm_forward.1} parent=31 // pred_check_branch
          %187 = sbr.rel (%p185) target = $region36
        $region35: #{network_nlsm_forward.1} parent=31 // pred_region
          %s188 = sand.u32 %s28, 1
          %s189 = scalar_lea.sflag [#allocation4], %s188
          %s190 = sand.u32 %s28, 1
          %s191 = smul.addr %s190, 32
          %s192 = scalar_lea.vmem [#allocation3], %s191
          %s193 = smul.u32 4, %s18
          %s195 = ssub.s32 512, 512
          %196 = vsyncadd %s189, %s195
          %s197 = smul.addr %s193, 128
          %s198 = scalar_lea.hbm %s0, %s197
          %s200 = sshll.u32 %s192, 4
          %s201 = int_to_ptr.vmem [resolvable:$true] %s200
          %203 = dma.hbm_to_vmem [thread:$0]  %s198, 512, %s201, %s189
        $region36: #{network_nlsm_forward.1} parent=31 // pred_fallthru
          _
      $region32: #{network_nlsm_forward.1} parent=5 // pred_fallthru
        _
      %p204 = scmp.le.s32.totalorder 1, %s18
      %p205 = scmp.lt.s32.totalorder %s18, 5
      %p206 = pnand %p204, %p205
      %p207 = pneg %p206
      // Predicated region
      $region37: #{network_nlsm_forward.1} parent=5 // pred_check
        _
      $region38: #{network_nlsm_forward.1} parent=5 // pred_check_branch
        %209 = sbr.rel (%p206) target = $region40
      $region39: #{network_nlsm_forward.1} parent=5 // pred_region
        %s210 = ssub.s32 %s18, 1
        %s211 = sand.u32 %s31, 1
        %s212 = scalar_lea.sflag [#allocation4], %s211
        %s213 = sand.u32 %s31, 1
        %s214 = smul.addr %s213, 32
        %s215 = scalar_lea.vmem [#allocation3], %s214
        // Predicated region
        $region41: #{network_nlsm_forward.1} parent=39 // pred_check
          %p216 = pneg %p44
        $region42: #{network_nlsm_forward.1} parent=39 // pred_check_branch
          %218 = sbr.rel (%p216) target = $region44
        $region43: #{network_nlsm_forward.1} parent=39 // pred_region
          %219 = dma.done %s212, 512
        $region44: #{network_nlsm_forward.1} parent=39 // pred_fallthru
          _
        %s220 = sand.u32 %s31, 1
        %s221 = scalar_lea.sflag [#allocation4], %s220
        %s222 = sand.u32 %s31, 1
        %s223 = smul.addr %s222, 32
        %s224 = scalar_lea.vmem [#allocation3], %s223
        %p225 = pneg %p44
        %p226 = pneg %p41
        %p227 = pneg %p65
        %p228 = pneg %p62
        %p229 = pneg %p86
        %p230 = pneg %p83
        %p231 = pneg %p107
        %p232 = pneg %p104
        %p233 = pneg %p128
        %p234 = pneg %p125
        %p235 = pneg %p154
        %p236 = pneg %p151
        %s237 = sand.u32 %s141, 1
        %s238 = scalar_lea.sflag [#allocation5], %s237
        %s239 = sand.u32 %s141, 1
        %s240 = smul.addr %s239, 4
        %s241 = scalar_lea.vmem [#allocation6], %s240
        %s242 = smul.u32 4, %s23
        %s243 = smul.u32 4, %s23
        %v244 = vld [vmem:[%s1] sm:$0xff]
        %v245 = vld [vmem:[%s1 + $0x8] sm:$0x3]
        %v246 = vld [vmem:[%s215] sm:$0x3f]
        %v247 = vld [vmem:[%s215 + $0x8] sm:$0x3f]
        %v248 = vld [vmem:[%s215 + $0x10] sm:$0x3f]
        %v249 = vld [vmem:[%s215 + $0x18] sm:$0x3f]
        %v250 = vld [vmem:[%s2] sm:$0xff]
        %v251 = vld [vmem:[%s2 + $0x8] sm:$0x3]
        %253 = vset.pattern.permute.xlu0 0
        %254 = vperm.xlu0 %253, %v250
        %v255 = vpop.permute.xlu0 %254
        %258 = vset.pattern.permute.xlu0 0
        %259 = vperm.xlu0 %258, %v251
        %v260 = vpop.permute.xlu0 %259
        %vm262 = vcmask 48128
        %v264 = vsel %vm262, %v244, 0
        %v267 = vsel %vm262, %v245, 0
        %vm269 = vcmask 1045504
        %v271 = vsel %vm269, %v246, 0
        %v274 = vsel %vm269, %v247, 0
        %v277 = vsel %vm269, %v248, 0
        %v280 = vsel %vm269, %v249, 0
        %282 = vmatprep.subr.mxu0 %v274
        %283 = vmatpush1.msra.mxu0 %v271
        %284 = vmatprep.subr.mxu0 0.0
        %285 = vmatpush1.msra.mxu0 0.0
        %286 = vmatprep.subr.mxu0 0.0
        %287 = vmatpush1.msra.mxu0 0.0
        %288 = vmatprep.subr.mxu0 0.0
        %289 = vmatpush1.msra.mxu0 0.0
        %290 = vmatprep.subr.mxu0 0.0
        %291 = vmatpush1.msra.mxu0 0.0
        %292 = vmatprep.subr.mxu0 0.0
        %293 = vmatpush1.msra.mxu0 0.0
        %294 = vmatprep.subr.mxu0 0.0
        %295 = vmatpush1.msra.mxu0 0.0
        %296 = vmatprep.subr.mxu0 0.0
        %297 = vmatpush1.msra.mxu0 0.0
        %298 = vmatprep.subr.mxu0 0.0
        %299 = vmatpush1.msra.mxu0 0.0
        %300 = vmatprep.subr.mxu0 0.0
        %301 = vmatpush1.msra.mxu0 0.0
        %302 = vmatprep.subr.mxu0 0.0
        %303 = vmatpush1.msra.mxu0 0.0
        %304 = vmatprep.subr.mxu0 0.0
        %305 = vmatpush1.msra.mxu0 0.0
        %306 = vmatprep.subr.mxu0 0.0
        %307 = vmatpush1.msra.mxu0 0.0
        %308 = vmatprep.subr.mxu0 0.0
        %309 = vmatpush1.msra.mxu0 0.0
        %310 = vmatprep.subr.mxu0 0.0
        %311 = vmatpush1.msra.mxu0 0.0
        %312 = vmatprep.subr.mxu0 0.0
        %313 = vmatpush1.msra.mxu0 0.0
        %314 = vmatprep.subr.mxu0 0.0
        %315 = vmatpush1.msra.mxu0 0.0
        %316 = vmatprep.subr.mxu0 0.0
        %317 = vmatpush1.msra.mxu0 0.0
        %318 = vmatprep.subr.mxu0 0.0
        %319 = vmatpush1.msra.mxu0 0.0
        %320 = vmatprep.subr.mxu0 0.0
        %321 = vmatpush1.msra.mxu0 0.0
        %322 = vmatprep.subr.mxu0 0.0
        %323 = vmatpush1.msra.mxu0 0.0
        %324 = vmatprep.subr.mxu0 0.0
        %325 = vmatpush1.msra.mxu0 0.0
        %326 = vmatprep.subr.mxu0 0.0
        %327 = vmatpush1.msra.mxu0 0.0
        %328 = vmatprep.subr.mxu0 0.0
        %329 = vmatpush1.msra.mxu0 0.0
        %330 = vmatprep.subr.mxu0 0.0
        %331 = vmatpush1.msra.mxu0 0.0
        %332 = vmatprep.subr.mxu0 0.0
        %333 = vmatpush1.msra.mxu0 0.0
        %334 = vmatprep.subr.mxu0 0.0
        %335 = vmatpush1.msra.mxu0 0.0
        %336 = vmatprep.subr.mxu0 0.0
        %337 = vmatpush1.msra.mxu0 0.0
        %338 = vmatprep.subr.mxu0 0.0
        %339 = vmatpush1.msra.mxu0 0.0
        %340 = vmatprep.subr.mxu0 0.0
        %341 = vmatpush1.msra.mxu0 0.0
        %342 = vmatprep.subr.mxu0 0.0
        %343 = vmatpush1.msra.mxu0 0.0
        %344 = vmatprep.subr.mxu0 0.0
        %345 = vmatpush1.msra.mxu0 0.0
        %346 = vmatprep.mubr.f32.mxu0 0.0
        %347 = vmatmul.mubr.f32.gmra.mrb[0].mxu0 %v264
        %v348 = vpop.f32.mrb[0].mxu0
        %v349 = vadd.f32 %v255, %v348
        %v350 = vpop.f32.mrb[0].mxu0
        %v351 = vadd.f32 %v255, %v350
        %352 = vmatprep.mubr.f32.mxu0 0.0
        %353 = vmatmul.mubr.f32.gmra.mrb[0].mxu0 %v267
        %v354 = vpop.f32.mrb[0].mxu0
        %v355 = vadd.f32 %v260, %v354
        %v356 = vpop.f32.mrb[0].mxu0
        %v357 = vadd.f32 %v260, %v356
        %358 = vdwg.mxu0
        %359 = vmatprep.subr.mxu0 %v280
        %360 = vmatpush1.msra.mxu0 %v277
        %361 = vmatprep.subr.mxu0 0.0
        %362 = vmatpush1.msra.mxu0 0.0
        %363 = vmatprep.subr.mxu0 0.0
        %364 = vmatpush1.msra.mxu0 0.0
        %365 = vmatprep.subr.mxu0 0.0
        %366 = vmatpush1.msra.mxu0 0.0
        %367 = vmatprep.subr.mxu0 0.0
        %368 = vmatpush1.msra.mxu0 0.0
        %369 = vmatprep.subr.mxu0 0.0
        %370 = vmatpush1.msra.mxu0 0.0
        %371 = vmatprep.subr.mxu0 0.0
        %372 = vmatpush1.msra.mxu0 0.0
        %373 = vmatprep.subr.mxu0 0.0
        %374 = vmatpush1.msra.mxu0 0.0
        %375 = vmatprep.subr.mxu0 0.0
        %376 = vmatpush1.msra.mxu0 0.0
        %377 = vmatprep.subr.mxu0 0.0
        %378 = vmatpush1.msra.mxu0 0.0
        %379 = vmatprep.subr.mxu0 0.0
        %380 = vmatpush1.msra.mxu0 0.0
        %381 = vmatprep.subr.mxu0 0.0
        %382 = vmatpush1.msra.mxu0 0.0
        %383 = vmatprep.subr.mxu0 0.0
        %384 = vmatpush1.msra.mxu0 0.0
        %385 = vmatprep.subr.mxu0 0.0
        %386 = vmatpush1.msra.mxu0 0.0
        %387 = vmatprep.subr.mxu0 0.0
        %388 = vmatpush1.msra.mxu0 0.0
        %389 = vmatprep.subr.mxu0 0.0
        %390 = vmatpush1.msra.mxu0 0.0
        %391 = vmatprep.subr.mxu0 0.0
        %392 = vmatpush1.msra.mxu0 0.0
        %393 = vmatprep.subr.mxu0 0.0
        %394 = vmatpush1.msra.mxu0 0.0
        %395 = vmatprep.subr.mxu0 0.0
        %396 = vmatpush1.msra.mxu0 0.0
        %397 = vmatprep.subr.mxu0 0.0
        %398 = vmatpush1.msra.mxu0 0.0
        %399 = vmatprep.subr.mxu0 0.0
        %400 = vmatpush1.msra.mxu0 0.0
        %401 = vmatprep.subr.mxu0 0.0
        %402 = vmatpush1.msra.mxu0 0.0
        %403 = vmatprep.subr.mxu0 0.0
        %404 = vmatpush1.msra.mxu0 0.0
        %405 = vmatprep.subr.mxu0 0.0
        %406 = vmatpush1.msra.mxu0 0.0
        %407 = vmatprep.subr.mxu0 0.0
        %408 = vmatpush1.msra.mxu0 0.0
        %409 = vmatprep.subr.mxu0 0.0
        %410 = vmatpush1.msra.mxu0 0.0
        %411 = vmatprep.subr.mxu0 0.0
        %412 = vmatpush1.msra.mxu0 0.0
        %413 = vmatprep.subr.mxu0 0.0
        %414 = vmatpush1.msra.mxu0 0.0
        %415 = vmatprep.subr.mxu0 0.0
        %416 = vmatpush1.msra.mxu0 0.0
        %417 = vmatprep.subr.mxu0 0.0
        %418 = vmatpush1.msra.mxu0 0.0
        %419 = vmatprep.subr.mxu0 0.0
        %420 = vmatpush1.msra.mxu0 0.0
        %421 = vmatprep.subr.mxu0 0.0
        %422 = vmatpush1.msra.mxu0 0.0
        %423 = vmatprep.mubr.f32.mxu0 0.0
        %424 = vmatmul.mubr.f32.gmra.mrb[0].mxu0 %v264
        %v425 = vpop.f32.mrb[0].mxu0
        %v426 = vadd.f32 %v255, %v425
        %v427 = vpop.f32.mrb[0].mxu0
        %v428 = vadd.f32 %v255, %v427
        %429 = vmatprep.mubr.f32.mxu0 0.0
        %430 = vmatmul.mubr.f32.gmra.mrb[0].mxu0 %v267
        %v431 = vpop.f32.mrb[0].mxu0
        %v432 = vadd.f32 %v260, %v431
        %v433 = vpop.f32.mrb[0].mxu0
        %v434 = vadd.f32 %v260, %v433
        %435 = vdwg.mxu0
        %v436 = vmul.f32 %v349, 0.5
        %v437 = vmul.f32 %v351, 0.5
        %v438 = vmul.f32 %v426, 0.5
        %v439 = vmul.f32 %v428, 0.5
        %v440 = vmul.f32 %v355, 0.5
        %v441 = vmul.f32 %v357, 0.5
        %v442 = vmul.f32 %v432, 0.5
        %v443 = vmul.f32 %v434, 0.5
        %v444 = vmax.f32 %v349, %v436
        %v445 = vmax.f32 %v351, %v437
        %v446 = vmax.f32 %v426, %v438
        %v447 = vmax.f32 %v428, %v439
        %v448 = vmax.f32 %v355, %v440
        %v449 = vmax.f32 %v357, %v441
        %v450 = vmax.f32 %v432, %v442
        %v451 = vmax.f32 %v434, %v443
        %v452 = vld [vmem:[%s3] sm:$0xff]
        %v453 = vld [vmem:[%s3 + $0x8] sm:$0x3]
        %455 = vset.pattern.permute.xlu0 0
        %456 = vperm.xlu0 %455, %v452
        %v457 = vpop.permute.xlu0 %456
        %460 = vset.pattern.permute.xlu0 0
        %461 = vperm.xlu0 %460, %v453
        %v462 = vpop.permute.xlu0 %461
        %v464 = vmul.f32 %v444, %v457
        %v465 = vmul.f32 %v445, %v457
        %v466 = vmul.f32 %v446, %v457
        %v467 = vmul.f32 %v447, %v457
        %v468 = vmul.f32 %v448, %v462
        %v469 = vmul.f32 %v449, %v462
        %v470 = vmul.f32 %v450, %v462
        %v471 = vmul.f32 %v451, %v462
        %vm472 = vcmask 1041408
        %v473 = vsel %vm472, %v468, 0.0
        %v474 = vadd.f32 %v464, %v473
        %v475 = vrot.slane %v474, 4
        %v476 = vadd.f32 %v474, %v475
        %v477 = vrot.slane %v476, 2
        %v478 = vadd.f32 %v476, %v477
        %v479 = vrot.slane %v478, 1
        %v480 = vadd.f32 %v478, %v479
        %v481 = vsel %vm472, %v469, 0.0
        %v482 = vadd.f32 %v465, %v481
        %v483 = vrot.slane %v482, 4
        %v484 = vadd.f32 %v482, %v483
        %v485 = vrot.slane %v484, 2
        %v486 = vadd.f32 %v484, %v485
        %v487 = vrot.slane %v486, 1
        %v488 = vadd.f32 %v486, %v487
        %v489 = vsel %vm472, %v470, 0.0
        %v490 = vadd.f32 %v466, %v489
        %v491 = vrot.slane %v490, 4
        %v492 = vadd.f32 %v490, %v491
        %v493 = vrot.slane %v492, 2
        %v494 = vadd.f32 %v492, %v493
        %v495 = vrot.slane %v494, 1
        %v496 = vadd.f32 %v494, %v495
        %v497 = vsel %vm472, %v471, 0.0
        %v498 = vadd.f32 %v467, %v497
        %v499 = vrot.slane %v498, 4
        %v500 = vadd.f32 %v498, %v499
        %v501 = vrot.slane %v500, 2
        %v502 = vadd.f32 %v500, %v501
        %v503 = vrot.slane %v502, 1
        %v504 = vadd.f32 %v502, %v503
        %s505 = sld [smem:[#allocation2]]
        %v506 = vstv %s505
        %v507 = vadd.f32 %v480, %v506
        %v508 = vadd.f32 %v488, %v506
        %v509 = vadd.f32 %v496, %v506
        %v510 = vadd.f32 %v504, %v506
        %v515 = vcombine.low %v507, %v508
        %v516 = vcombine.low %v509, %v510
        %v518 = vunpack.c.l.s4 1966171168
        %v519 = vunpack.c.0.s8 %v518
        %v520 = vlaneseq
        %v521 = vshrl.u32 %v520, 7
        %v522 = vsub.s32 %v519, %v521
        %v523 = vrot.slane %v515, %v522
        %v525 = vunpack.c.l.s4 1966171168
        %v526 = vunpack.c.0.s8 %v525
        %v527 = vlaneseq
        %v528 = vshrl.u32 %v527, 7
        %v529 = vsub.s32 %v526, %v528
        %v530 = vrot.slane %v516, %v529
        %v531 = vcombine.low %v523, %v530
        %v533 = vunpack.c.l.s4 1966171168
        %v534 = vunpack.c.0.s8 %v533
        %v535 = vlaneseq
        %v536 = vshrl.u32 %v535, 7
        %v537 = vsub.s32 %v534, %v536
        %v538 = vrot.slane %v531, %v537
        %v540 = vlaneseq
        %vm541 = vcmp.ge.s32.totalorder %v540, 0
        %vm542 = vcmp.lt.s32.totalorder %v540, 512
        %vm543 = vmand %vm541, %vm542
        %544 = vst.msk [vmem:[%s241] sm:$0xf] %vm543, %v538
        %s545 = sand.u32 %s141, 1
        %s546 = scalar_lea.sflag [#allocation5], %s545
        %s547 = sand.u32 %s141, 1
        %s548 = smul.addr %s547, 4
        %s549 = scalar_lea.vmem [#allocation6], %s548
        // Predicated region
        $region45: #{network_nlsm_forward.1} parent=39 // pred_check
          %p550 = pneg %p151
        $region46: #{network_nlsm_forward.1} parent=39 // pred_check_branch
          %552 = sbr.rel (%p550) target = $region48
        $region47: #{network_nlsm_forward.1} parent=39 // pred_region
          %s553 = smul.u32 4, %s23
          %s555 = ssub.s32 64, 64
          %556 = vsyncadd %s546, %s555
          %s557 = smul.addr %s553, 16
          %s558 = scalar_lea.hbm %s5, %s557
          %s560 = sshll.u32 %s549, 4
          %s561 = int_to_ptr.vmem [resolvable:$true] %s560
          %563 = dma.vmem_to_hbm [thread:$0]  %s561, 64, %s558, %s546
        $region48: #{network_nlsm_forward.1} parent=39 // pred_fallthru
          _
      $region40: #{network_nlsm_forward.1} parent=5 // pred_fallthru
        _
      %p564 = scmp.le.s32.totalorder 2, %s18
      // Predicated region
      $region49: #{network_nlsm_forward.1} parent=5 // pred_check
        %p565 = pneg %p564
      $region50: #{network_nlsm_forward.1} parent=5 // pred_check_branch
        %567 = sbr.rel (%p565) target = $region52
      $region51: #{network_nlsm_forward.1} parent=5 // pred_region
        %s568 = ssub.s32 %s18, 2
        // Predicated region
        $region53: #{network_nlsm_forward.1} parent=51 // pred_check
          %p569 = pneg %p157
        $region54: #{network_nlsm_forward.1} parent=51 // pred_check_branch
          %571 = sbr.rel (%p569) target = $region56
        $region55: #{network_nlsm_forward.1} parent=51 // pred_region
          %s572 = sand.u32 %s142, 1
          %s573 = scalar_lea.sflag [#allocation5], %s572
          %s574 = sand.u32 %s142, 1
          %s575 = smul.addr %s574, 4
          %s576 = scalar_lea.vmem [#allocation6], %s575
          %577 = dma.done %s573, 64
        $region56: #{network_nlsm_forward.1} parent=51 // pred_fallthru
          _
      $region52: #{network_nlsm_forward.1} parent=5 // pred_fallthru
        _
    $region6: #{network_nlsm_forward.1} parent=1 // loop_footer
      %s22 = sadd.s32 1, %s18
    $region7: #{network_nlsm_forward.1} parent=1 // loop_footer_branch
      %17 = sbr.rel target = $region3
    $region8: #{network_nlsm_forward.1} parent=1 // loop_exit
      _
    %578 = vsyncpa [#allocation4], 1
    %s579 = scalar_lea.sflag [#allocation4], 1
    %580 = vsyncpa %s579, 1
    %581 = vsyncpa [#allocation5], 1
    %s582 = scalar_lea.sflag [#allocation5], 1
    %583 = vsyncpa %s582, 1

</llo_original>
